<compile_context>
chip_gen: v6e
topology: v6e:2x2x1
jax: 0.10.0
libtpu: 0.0.40
codegen_flags: <defaults>
</compile_context>

<pallas_src>
import functools

import jax
import jax.numpy as jnp
from jax.experimental import pallas as pl
from jax.experimental.pallas import tpu as pltpu

_LANES = 128
_TILE_ROW_GROUPS = 512  # packed row-groups per grid step (= 4096 batch rows for C=16)


def _classifier_kernel(x_ref, w_ref, b_ref, seg_ref, o_ref):
    # x_ref  : (tbg, G*F)   G batch rows packed per lane-row
    # w_ref  : (G*F, G*C)   block-diagonal replicated W^T
    # b_ref  : (1,   G*C)   tiled bias
    # seg_ref: (G*C, G*C)   0/1 segment-sum matrix (block-diag of ones)
    # o_ref  : (tbg, G*C)   packed softmax probabilities
    h = jnp.dot(x_ref[...], w_ref[...], preferred_element_type=jnp.float32)
    h = h + b_ref[...]

    # Per packed row, the global max is >= every segment's max and constant across
    # each segment, so subtracting it is a valid, numerically stable softmax shift.
    m = jnp.max(h, axis=-1, keepdims=True)
    e = jnp.exp(h - m)
    # Per-segment denominators via one MXU matmul (no cross-lane relayout needed).
    denom = jnp.dot(e, seg_ref[...], preferred_element_type=jnp.float32)
    o_ref[...] = (e * pl.reciprocal(denom, approx=False)).astype(o_ref.dtype)


def _pack_params(weight, bias, group):
    """Replicated block-diagonal weight / tiled bias / segment-sum matrix.

    Cheap (G*F x G*C); under jit it is fused/CSE'd with the rest of the program.
    """
    num_classes, _ = weight.shape
    w_t = jnp.transpose(weight)  # (F, C)
    w_packed = jnp.kron(jnp.eye(group, dtype=w_t.dtype), w_t)              # (G*F, G*C)
    b_packed = jnp.tile(jnp.reshape(bias, (1, num_classes)), (1, group))   # (1, G*C)
    seg = jnp.kron(jnp.eye(group, dtype=jnp.float32),
                   jnp.ones((num_classes, num_classes), dtype=jnp.float32))  # (G*C, G*C)
    return w_packed, b_packed, seg


@functools.partial(jax.jit, static_argnames=("tile_row_groups",))
def autoquant_classifier(x, weight, bias, *, tile_row_groups=_TILE_ROW_GROUPS):
    """Forward pass of AutoquantClassifier: softmax(x.reshape(-1, F) @ W^T + b, axis=1).

    x      : any shape whose trailing elements flatten into rows of num_features
    weight : (num_classes, num_features)   (PyTorch nn.Linear convention)
    bias   : (num_classes,)
    returns: (batch, num_classes) float32 probabilities
    """
    num_classes, num_features = weight.shape
    x2d = jnp.reshape(x, (-1, num_features))
    batch = x2d.shape[0]

    # How many batch rows fit densely into the 128-lane dimension.
    if num_classes <= _LANES and _LANES % num_classes == 0:
        group = _LANES // num_classes
    else:
        group = 1  # lane-sparse fallback; still correct

    gf = group * num_features
    gc = group * num_classes

    # Pad the batch so the packed row-group axis is a whole number of tiles.
    bg_raw = pl.cdiv(batch, group)
    tbg = min(tile_row_groups, bg_raw)
    bg = pl.cdiv(bg_raw, tbg) * tbg
    batch_pad = bg * group
    if batch_pad != batch:
        x2d = jnp.pad(x2d, ((0, batch_pad - batch), (0, 0)))
    x_packed = jnp.reshape(x2d, (bg, gf))  # contiguous row-major reshape (free)

    w_packed, b_packed, seg = _pack_params(weight, bias, group)

    grid = (bg // tbg,)
    flops = bg * (2 * gf * gc + 2 * gc * gc)
    bytes_accessed = (
        x_packed.size * x_packed.dtype.itemsize
        + w_packed.size * w_packed.dtype.itemsize
        + b_packed.size * b_packed.dtype.itemsize
        + seg.size * seg.dtype.itemsize
        + bg * gc * 4
    )

    out_packed = pl.pallas_call(
        _classifier_kernel,
        out_shape=jax.ShapeDtypeStruct((bg, gc), jnp.float32),
        grid_spec=pltpu.PrefetchScalarGridSpec(
            num_scalar_prefetch=0,
            grid=grid,
            in_specs=[
                pl.BlockSpec((tbg, gf), lambda i: (i, 0)),   # x: streams per step
                pl.BlockSpec((gf, gc), lambda i: (0, 0)),    # weight: resident
                pl.BlockSpec((1, gc), lambda i: (0, 0)),     # bias: resident
                pl.BlockSpec((gc, gc), lambda i: (0, 0)),    # segment matrix: resident
            ],
            out_specs=pl.BlockSpec((tbg, gc), lambda i: (i, 0)),
        ),
        compiler_params=pltpu.CompilerParams(
            dimension_semantics=("parallel",),  # shards grid steps across v7x's 2 TCs
        ),
        cost_estimate=pl.CostEstimate(
            flops=int(flops),
            transcendentals=int(bg * gc),
            bytes_accessed=int(bytes_accessed),
        ),
    )(x_packed, w_packed, b_packed, seg)

    # Unpack back to (batch, num_classes); drop padded rows.
    out = jnp.reshape(out_packed, (batch_pad, num_classes))[:batch]
    return out


def _reference(x, weight, bias):
    num_classes, num_features = weight.shape
    h = jnp.reshape(x, (-1, num_features)).astype(jnp.float32)
    h = h @ weight.T.astype(jnp.float32) + bias.astype(jnp.float32)
    return jax.nn.softmax(h, axis=1)


if __name__ == "__main__":
    num_features = 32
    num_classes = 16

    key = jax.random.PRNGKey(0)
    kx, kw, kb, kx2 = jax.random.split(key, 4)

    # Small input: flattened rows give batch = 4*8 = 32 rows of num_features.
    x = jax.random.normal(kx, (4, 8, num_features), dtype=jnp.float32)

    # Parameter init mimicking torch.nn.Linear's uniform(-1/sqrt(F), 1/sqrt(F)).
    bound = 1.0 / (num_features ** 0.5)
    weight = jax.random.uniform(
        kw, (num_classes, num_features), minval=-bound, maxval=bound, dtype=jnp.float32
    )
    bias = jax.random.uniform(
        kb, (num_classes,), minval=-bound, maxval=bound, dtype=jnp.float32
    )

    out = jax.block_until_ready(autoquant_classifier(x, weight, bias))
    ref = _reference(x, weight, bias)
    assert out.shape == (32, num_classes)
    assert jnp.allclose(out, ref, atol=1e-5, rtol=1e-5), "mismatch vs reference"
    assert jnp.allclose(jnp.sum(out, axis=1), 1.0, atol=1e-5), "softmax rows must sum to 1"

    # Larger ragged batch: exercises row padding, packing and (when batch is large
    # enough) the multi-step parallel grid axis.
    x_big = jax.random.normal(kx2, (2500, num_features), dtype=jnp.float32)
    out_big = jax.block_until_ready(autoquant_classifier(x_big, weight, bias))
    ref_big = _reference(x_big, weight, bias)
    assert out_big.shape == (2500, num_classes)
    assert jnp.allclose(out_big, ref_big, atol=1e-5, rtol=1e-5), "mismatch vs reference (big)"
    assert jnp.allclose(jnp.sum(out_big, axis=1), 1.0, atol=1e-5), "row sums (big)"

    # Multi-tile batch: forces >1 grid step to exercise pipelining + parallel sharding.
    x_multi = jax.random.normal(kx2, (9000, num_features), dtype=jnp.float32)
    out_multi = jax.block_until_ready(autoquant_classifier(x_multi, weight, bias))
    ref_multi = _reference(x_multi, weight, bias)
    assert jnp.allclose(out_multi, ref_multi, atol=1e-5, rtol=1e-5), "mismatch (multi-tile)"

    print("KERNEL_OK")
</pallas_src>

<mosaic_0001>
module attributes {stable_mosaic.version = 11 : i64} {
  func.func @_classifier_kernel(%arg0: i32, %arg1: memref<4x256xf32, #tpu.memory_space<vmem>>, %arg2: memref<256x128xf32, #tpu.memory_space<vmem>>, %arg3: memref<1x128xf32, #tpu.memory_space<vmem>>, %arg4: memref<128x128xf32, #tpu.memory_space<vmem>>, %arg5: memref<4x128xf32, #tpu.memory_space<vmem>>) attributes {dimension_semantics = [#tpu.dimension_semantics<parallel>], iteration_bounds = array<i64: 1>, scalar_prefetch = 0 : i64, scratch_operands = 0 : i64, tpu.core_type = #tpu.core_type<tc>, window_params = [{transform_indices = @transform_0, window_bounds = array<i64: 4, 256>}, {pipeline_mode = #tpu.pipeline_mode<synchronous>, transform_indices = @transform_1, window_bounds = array<i64: 256, 128>}, {pipeline_mode = #tpu.pipeline_mode<synchronous>, transform_indices = @transform_2, window_bounds = array<i64: 1, 128>}, {pipeline_mode = #tpu.pipeline_mode<synchronous>, transform_indices = @transform_3, window_bounds = array<i64: 128, 128>}, {transform_indices = @transform_4, window_bounds = array<i64: 4, 128>}]} {
    %c0 = arith.constant 0 : index
    %c0_0 = arith.constant 0 : index
    %0 = vector.load %arg1[%c0, %c0_0] : memref<4x256xf32, #tpu.memory_space<vmem>>, vector<4x256xf32>
    %c0_1 = arith.constant 0 : index
    %c0_2 = arith.constant 0 : index
    %1 = vector.load %arg2[%c0_1, %c0_2] : memref<256x128xf32, #tpu.memory_space<vmem>>, vector<256x128xf32>
    %cst = arith.constant dense<0.000000e+00> : vector<4x128xf32>
    %2 = tpu.matmul %0, %1, %cst {dimension_numbers = #tpu.dot_dimension_numbers<[1], [0], [0], [1], [0, 0, 1, 1], [], []>} : vector<4x256xf32>, vector<256x128xf32>, vector<4x128xf32> -> vector<4x128xf32>
    %c0_3 = arith.constant 0 : index
    %c0_4 = arith.constant 0 : index
    %3 = vector.load %arg3[%c0_3, %c0_4] : memref<1x128xf32, #tpu.memory_space<vmem>>, vector<1x128xf32>
    %4 = vector.broadcast %3 : vector<1x128xf32> to vector<4x128xf32>
    %5 = arith.addf %2, %4 : vector<4x128xf32>
    %cst_5 = arith.constant dense<0xFF800000> : vector<4xf32>
    %6 = vector.multi_reduction <maximumf>, %5, %cst_5 [1] : vector<4x128xf32> to vector<4xf32>
    %7 = vector.shape_cast %6 : vector<4xf32> to vector<4x1xf32>
    %8 = vector.broadcast %7 : vector<4x1xf32> to vector<4x128xf32>
    %9 = arith.subf %5, %8 : vector<4x128xf32>
    %10 = math.exp %9 : vector<4x128xf32>
    %c0_6 = arith.constant 0 : index
    %c0_7 = arith.constant 0 : index
    %11 = vector.load %arg4[%c0_6, %c0_7] : memref<128x128xf32, #tpu.memory_space<vmem>>, vector<128x128xf32>
    %cst_8 = arith.constant dense<0.000000e+00> : vector<4x128xf32>
    %12 = tpu.matmul %10, %11, %cst_8 {dimension_numbers = #tpu.dot_dimension_numbers<[1], [0], [0], [1], [0, 0, 1, 1], [], []>} : vector<4x128xf32>, vector<128x128xf32>, vector<4x128xf32> -> vector<4x128xf32>
    %13 = tpu.reciprocal %12 : vector<4x128xf32> -> vector<4x128xf32>
    %14 = arith.mulf %10, %13 : vector<4x128xf32>
    %c0_9 = arith.constant 0 : index
    %c0_10 = arith.constant 0 : index
    %15 = vector.load %arg5[%c0_9, %c0_10] : memref<4x128xf32, #tpu.memory_space<vmem>>, vector<4x128xf32>
    tpu.vector_store %arg5[%c0_9, %c0_10], %14 {strides = array<i32>} : memref<4x128xf32, #tpu.memory_space<vmem>>, vector<4x128xf32>,
    return
  }
  func.func @transform_0(%arg0: i32) -> (i32, i32) {
    %c0_i32 = arith.constant 0 : i32
    %c0_i32_0 = arith.constant 0 : i32
    return %arg0, %c0_i32 : i32, i32
  }
  func.func @transform_1(%arg0: i32) -> (i32, i32) {
    %c0_i32 = arith.constant 0 : i32
    %c0_i32_0 = arith.constant 0 : i32
    %c0_i32_1 = arith.constant 0 : i32
    return %c0_i32, %c0_i32_0 : i32, i32
  }
  func.func @transform_2(%arg0: i32) -> (i32, i32) {
    %c0_i32 = arith.constant 0 : i32
    %c0_i32_0 = arith.constant 0 : i32
    %c0_i32_1 = arith.constant 0 : i32
    return %c0_i32, %c0_i32_0 : i32, i32
  }
  func.func @transform_3(%arg0: i32) -> (i32, i32) {
    %c0_i32 = arith.constant 0 : i32
    %c0_i32_0 = arith.constant 0 : i32
    %c0_i32_1 = arith.constant 0 : i32
    return %c0_i32, %c0_i32_0 : i32, i32
  }
  func.func @transform_4(%arg0: i32) -> (i32, i32) {
    %c0_i32 = arith.constant 0 : i32
    %c0_i32_0 = arith.constant 0 : i32
    return %arg0, %c0_i32 : i32, i32
  }
}

</mosaic_0001>

<llo_original>
// kernel: autoquant_classifier.1
$region0: #{autoquant_classifier.1}
  #allocation0 [shape = 'u32[]', space=smem, size = 0x4, offset = 0x4, fixed_abs, tag = 'smem constant byte address 0x4 - core index']
  #allocation1 [shape = 'u32[144,128]{1,0:T(1,128)}', space=vmem, size = 0x12000, scoped, tag = 'internal scratch']
  %s0 = inlined_call_operand.vmem [shape: f32[4,256], index: 0, kind: input, shape index: {}]
  %s1 = inlined_call_operand.vmem [shape: f32[256,128], index: 1, kind: input, shape index: {}]
  %s2 = inlined_call_operand.vmem [shape: f32[1,128], index: 2, kind: input, shape index: {}]
  %s3 = inlined_call_operand.vmem [shape: f32[128,128], index: 3, kind: input, shape index: {}]
  %s4 = inlined_call_operand.vmem [shape: f32[4,128], index: 4, kind: output, shape index: {}]
  %s5 = sld [smem:[#allocation0]]
  $region26: #{autoquant_classifier.1} parent=0
    _
  %s7 = ssub.s32 1, %s5
  %s8 = scalar_select 0, %s7, %s5
  // Predicated region
  $region2: #{autoquant_classifier.1} parent=0 // pred_check
    _
  $region3: #{autoquant_classifier.1} parent=0 // pred_check_branch
    %10 = sbr.rel (0) target = $region5
  $region4: #{autoquant_classifier.1} parent=0 // pred_region
    _
  $region5: #{autoquant_classifier.1} parent=0 // pred_fallthru
    _
  // Predicated region
  $region6: #{autoquant_classifier.1} parent=0 // pred_check
    _
  $region7: #{autoquant_classifier.1} parent=0 // pred_check_branch
    %12 = sbr.rel (0) target = $region9
  $region8: #{autoquant_classifier.1} parent=0 // pred_region
    _
  $region9: #{autoquant_classifier.1} parent=0 // pred_fallthru
    _
  // Predicated region
  $region10: #{autoquant_classifier.1} parent=0 // pred_check
    _
  $region11: #{autoquant_classifier.1} parent=0 // pred_check_branch
    %14 = sbr.rel (0) target = $region13
  $region12: #{autoquant_classifier.1} parent=0 // pred_region
    _
  $region13: #{autoquant_classifier.1} parent=0 // pred_fallthru
    _
  // Predicated region
  $region14: #{autoquant_classifier.1} parent=0 // pred_check
    _
  $region15: #{autoquant_classifier.1} parent=0 // pred_check_branch
    %16 = sbr.rel (0) target = $region17
  $region16: #{autoquant_classifier.1} parent=0 // pred_region
    _
  $region17: #{autoquant_classifier.1} parent=0 // pred_fallthru
    _
  %v17 = vld [vmem:[%s0] sm:$0xff]
  %v18 = vld [vmem:[%s1] sm:$0xff]
  %v19 = vld [vmem:[%s1 + $0x8] sm:$0xff]
  %v20 = vld [vmem:[%s1 + $0x10] sm:$0xff]
  %v21 = vld [vmem:[%s1 + $0x18] sm:$0xff]
  %v22 = vld [vmem:[%s1 + $0x20] sm:$0xff]
  %v23 = vld [vmem:[%s1 + $0x28] sm:$0xff]
  %v24 = vld [vmem:[%s1 + $0x30] sm:$0xff]
  %v25 = vld [vmem:[%s1 + $0x38] sm:$0xff]
  %v26 = vld [vmem:[%s1 + $0x40] sm:$0xff]
  %v27 = vld [vmem:[%s1 + $0x48] sm:$0xff]
  %v28 = vld [vmem:[%s1 + $0x50] sm:$0xff]
  %v29 = vld [vmem:[%s1 + $0x58] sm:$0xff]
  %v30 = vld [vmem:[%s1 + $0x60] sm:$0xff]
  %v31 = vld [vmem:[%s1 + $0x68] sm:$0xff]
  %v32 = vld [vmem:[%s1 + $0x70] sm:$0xff]
  %v33 = vld [vmem:[%s1 + $0x78] sm:$0xff]
  %v34 = vld [vmem:[%s1 + $0x80] sm:$0xff]
  %v35 = vld [vmem:[%s1 + $0x88] sm:$0xff]
  %v36 = vld [vmem:[%s1 + $0x90] sm:$0xff]
  %v37 = vld [vmem:[%s1 + $0x98] sm:$0xff]
  %v38 = vld [vmem:[%s1 + $0xa0] sm:$0xff]
  %v39 = vld [vmem:[%s1 + $0xa8] sm:$0xff]
  %v40 = vld [vmem:[%s1 + $0xb0] sm:$0xff]
  %v41 = vld [vmem:[%s1 + $0xb8] sm:$0xff]
  %v42 = vld [vmem:[%s1 + $0xc0] sm:$0xff]
  %v43 = vld [vmem:[%s1 + $0xc8] sm:$0xff]
  %v44 = vld [vmem:[%s1 + $0xd0] sm:$0xff]
  %v45 = vld [vmem:[%s1 + $0xd8] sm:$0xff]
  %v46 = vld [vmem:[%s1 + $0xe0] sm:$0xff]
  %v47 = vld [vmem:[%s1 + $0xe8] sm:$0xff]
  %v48 = vld [vmem:[%s1 + $0xf0] sm:$0xff]
  %v49 = vld [vmem:[%s1 + $0xf8] sm:$0xff]
  %v50 = vld [vmem:[%s2] sm:$0x1]
  %v52 = vlaneseq
  %v53 = vshrl.u32 %v52, 7
  %v54 = vsub.s32 0, %v53
  %v55 = vrot.slane %v50, %v54
  %v58 = vcombine.high %v17, %v17
  %60 = vmatprep.subr.mxu0 0.0
  %61 = vmatpush1.msra.mxu0 %v33
  %62 = vmatprep.subr.mxu0 0.0
  %63 = vmatpush1.msra.mxu0 %v32
  %64 = vmatprep.subr.mxu0 0.0
  %65 = vmatpush1.msra.mxu0 %v31
  %66 = vmatprep.subr.mxu0 0.0
  %67 = vmatpush1.msra.mxu0 %v30
  %68 = vmatprep.subr.mxu0 0.0
  %69 = vmatpush1.msra.mxu0 %v29
  %70 = vmatprep.subr.mxu0 0.0
  %71 = vmatpush1.msra.mxu0 %v28
  %72 = vmatprep.subr.mxu0 0.0
  %73 = vmatpush1.msra.mxu0 %v27
  %74 = vmatprep.subr.mxu0 0.0
  %75 = vmatpush1.msra.mxu0 %v26
  %76 = vmatprep.subr.mxu0 0.0
  %77 = vmatpush1.msra.mxu0 %v25
  %78 = vmatprep.subr.mxu0 0.0
  %79 = vmatpush1.msra.mxu0 %v24
  %80 = vmatprep.subr.mxu0 0.0
  %81 = vmatpush1.msra.mxu0 %v23
  %82 = vmatprep.subr.mxu0 0.0
  %83 = vmatpush1.msra.mxu0 %v22
  %84 = vmatprep.subr.mxu0 0.0
  %85 = vmatpush1.msra.mxu0 %v21
  %86 = vmatprep.subr.mxu0 0.0
  %87 = vmatpush1.msra.mxu0 %v20
  %88 = vmatprep.subr.mxu0 0.0
  %89 = vmatpush1.msra.mxu0 %v19
  %90 = vmatprep.subr.mxu0 0.0
  %91 = vmatpush1.msra.mxu0 %v18
  %92 = vmatprep.subr.mxu0 0.0
  %93 = vmatpush2.msra.mxu0 %v49
  %94 = vmatprep.subr.mxu0 0.0
  %95 = vmatpush2.msra.mxu0 %v48
  %96 = vmatprep.subr.mxu0 0.0
  %97 = vmatpush2.msra.mxu0 %v47
  %98 = vmatprep.subr.mxu0 0.0
  %99 = vmatpush2.msra.mxu0 %v46
  %100 = vmatprep.subr.mxu0 0.0
  %101 = vmatpush2.msra.mxu0 %v45
  %102 = vmatprep.subr.mxu0 0.0
  %103 = vmatpush2.msra.mxu0 %v44
  %104 = vmatprep.subr.mxu0 0.0
  %105 = vmatpush2.msra.mxu0 %v43
  %106 = vmatprep.subr.mxu0 0.0
  %107 = vmatpush2.msra.mxu0 %v42
  %108 = vmatprep.subr.mxu0 0.0
  %109 = vmatpush2.msra.mxu0 %v41
  %110 = vmatprep.subr.mxu0 0.0
  %111 = vmatpush2.msra.mxu0 %v40
  %112 = vmatprep.subr.mxu0 0.0
  %113 = vmatpush2.msra.mxu0 %v39
  %114 = vmatprep.subr.mxu0 0.0
  %115 = vmatpush2.msra.mxu0 %v38
  %116 = vmatprep.subr.mxu0 0.0
  %117 = vmatpush2.msra.mxu0 %v37
  %118 = vmatprep.subr.mxu0 0.0
  %119 = vmatpush2.msra.mxu0 %v36
  %120 = vmatprep.subr.mxu0 0.0
  %121 = vmatpush2.msra.mxu0 %v35
  %122 = vmatprep.subr.mxu0 0.0
  %123 = vmatpush2.msra.mxu0 %v34
  %124 = vmatprep.mubr.f32.mxu0 %v58
  %125 = vmatmul.mubr.f32.gmra.mxu0 %v17
  %v126 = vpop.f32.mrf.mxu0
  %v127 = vadd.f32 %v55, %v126
  %v128 = vpop.f32.mrf.mxu0
  %129 = vdwg.mxu0
  %vm130 = vcmask 1043456
  %v131 = vsel %vm130, %v127, -inf
  %132 = vmax.xlane.f32.xlu0 %v131
  %v133 = vpop.xlane.xlu0 %132
  %v134 = vsub.f32 %v127, %v133
  %v135 = vmul.f32 %v134, 1.442695
  %v136 = vpow.pop %v135
  %v137 = vld [vmem:[%s3] sm:$0xff]
  %v138 = vld [vmem:[%s3 + $0x8] sm:$0xff]
  %v139 = vld [vmem:[%s3 + $0x10] sm:$0xff]
  %v140 = vld [vmem:[%s3 + $0x18] sm:$0xff]
  %v141 = vld [vmem:[%s3 + $0x20] sm:$0xff]
  %v142 = vld [vmem:[%s3 + $0x28] sm:$0xff]
  %v143 = vld [vmem:[%s3 + $0x30] sm:$0xff]
  %v144 = vld [vmem:[%s3 + $0x38] sm:$0xff]
  %v145 = vld [vmem:[%s3 + $0x40] sm:$0xff]
  %v146 = vld [vmem:[%s3 + $0x48] sm:$0xff]
  %v147 = vld [vmem:[%s3 + $0x50] sm:$0xff]
  %v148 = vld [vmem:[%s3 + $0x58] sm:$0xff]
  %v149 = vld [vmem:[%s3 + $0x60] sm:$0xff]
  %v150 = vld [vmem:[%s3 + $0x68] sm:$0xff]
  %v151 = vld [vmem:[%s3 + $0x70] sm:$0xff]
  %v152 = vld [vmem:[%s3 + $0x78] sm:$0xff]
  %153 = vmatprep.subr.mxu0 0.0
  %154 = vmatpush1.msra.mxu0 %v152
  %155 = vmatprep.subr.mxu0 0.0
  %156 = vmatpush1.msra.mxu0 %v151
  %157 = vmatprep.subr.mxu0 0.0
  %158 = vmatpush1.msra.mxu0 %v150
  %159 = vmatprep.subr.mxu0 0.0
  %160 = vmatpush1.msra.mxu0 %v149
  %161 = vmatprep.subr.mxu0 0.0
  %162 = vmatpush1.msra.mxu0 %v148
  %163 = vmatprep.subr.mxu0 0.0
  %164 = vmatpush1.msra.mxu0 %v147
  %165 = vmatprep.subr.mxu0 0.0
  %166 = vmatpush1.msra.mxu0 %v146
  %167 = vmatprep.subr.mxu0 0.0
  %168 = vmatpush1.msra.mxu0 %v145
  %169 = vmatprep.subr.mxu0 0.0
  %170 = vmatpush1.msra.mxu0 %v144
  %171 = vmatprep.subr.mxu0 0.0
  %172 = vmatpush1.msra.mxu0 %v143
  %173 = vmatprep.subr.mxu0 0.0
  %174 = vmatpush1.msra.mxu0 %v142
  %175 = vmatprep.subr.mxu0 0.0
  %176 = vmatpush1.msra.mxu0 %v141
  %177 = vmatprep.subr.mxu0 0.0
  %178 = vmatpush1.msra.mxu0 %v140
  %179 = vmatprep.subr.mxu0 0.0
  %180 = vmatpush1.msra.mxu0 %v139
  %181 = vmatprep.subr.mxu0 0.0
  %182 = vmatpush1.msra.mxu0 %v138
  %183 = vmatprep.subr.mxu0 0.0
  %184 = vmatpush1.msra.mxu0 %v137
  %185 = vmatprep.subr.mxu0 0.0
  %186 = vmatpush2.msra.mxu0 0.0
  %187 = vmatprep.subr.mxu0 0.0
  %188 = vmatpush2.msra.mxu0 0.0
  %189 = vmatprep.subr.mxu0 0.0
  %190 = vmatpush2.msra.mxu0 0.0
  %191 = vmatprep.subr.mxu0 0.0
  %192 = vmatpush2.msra.mxu0 0.0
  %193 = vmatprep.subr.mxu0 0.0
  %194 = vmatpush2.msra.mxu0 0.0
  %195 = vmatprep.subr.mxu0 0.0
  %196 = vmatpush2.msra.mxu0 0.0
  %197 = vmatprep.subr.mxu0 0.0
  %198 = vmatpush2.msra.mxu0 0.0
  %199 = vmatprep.subr.mxu0 0.0
  %200 = vmatpush2.msra.mxu0 0.0
  %201 = vmatprep.subr.mxu0 0.0
  %202 = vmatpush2.msra.mxu0 0.0
  %203 = vmatprep.subr.mxu0 0.0
  %204 = vmatpush2.msra.mxu0 0.0
  %205 = vmatprep.subr.mxu0 0.0
  %206 = vmatpush2.msra.mxu0 0.0
  %207 = vmatprep.subr.mxu0 0.0
  %208 = vmatpush2.msra.mxu0 0.0
  %209 = vmatprep.subr.mxu0 0.0
  %210 = vmatpush2.msra.mxu0 0.0
  %211 = vmatprep.subr.mxu0 0.0
  %212 = vmatpush2.msra.mxu0 0.0
  %213 = vmatprep.subr.mxu0 0.0
  %214 = vmatpush2.msra.mxu0 0.0
  %215 = vmatprep.subr.mxu0 0.0
  %216 = vmatpush2.msra.mxu0 0.0
  %217 = vmatprep.mubr.f32.mxu0 0.0
  %218 = vmatmul.mubr.f32.gmra.mxu0 %v136
  %v219 = vpop.f32.mrf.mxu0
  %v220 = vadd.f32 0.0, %v219
  %v221 = vpop.f32.mrf.mxu0
  %222 = vdwg.mxu0
  %v223 = vrcp.pop %v220
  %v224 = vmul.f32 %v136, %v223
  %225 = vst [vmem:[%s4] sm:$0xf] %v224
  // Predicated region
  $region18: #{autoquant_classifier.1} parent=0 // pred_check
    _
  $region19: #{autoquant_classifier.1} parent=0 // pred_check_branch
    %227 = sbr.rel (0) target = $region21
  $region20: #{autoquant_classifier.1} parent=0 // pred_region
    _
  $region21: #{autoquant_classifier.1} parent=0 // pred_fallthru
    _
  // Predicated region
  $region22: #{autoquant_classifier.1} parent=0 // pred_check
    _
  $region23: #{autoquant_classifier.1} parent=0 // pred_check_branch
    %229 = sbr.rel (0) target = $region25
  $region24: #{autoquant_classifier.1} parent=0 // pred_region
    _
  $region25: #{autoquant_classifier.1} parent=0 // pred_fallthru
    _

</llo_original>
